<compile_context>
chip_gen: v7x
topology: tpu7x:2x2x1
jax: 0.10.0
libtpu: 0.0.40
codegen_flags: <defaults>
</compile_context>

<pallas_src>
import numpy as np
import jax
import jax.numpy as jnp
from jax.experimental import pallas as pl
from jax.experimental.pallas import tpu as pltpu

# ---------------- synthetic task configuration (mirrors __init__ shapes) ----------------
OWN_OBS_DIM = 8            # decomposer.own_obs_dim
OBS_NF_EN = 5              # decomposer.obs_nf_en
OBS_NF_AL = 6              # decomposer.obs_nf_al
N_ACTIONS_NO_ATTACK = 6    # decomposer.n_actions_no_attack
N_AGENTS = 4               # task2n_agents[task]
N_ALLIES = N_AGENTS - 1
N_ENEMIES = 3
ID_LENGTH = 4              # args.id_length
ATTN_EMBED_DIM = 16        # args.attn_embed_dim
ENTITY_EMBED_DIM = 16      # args.entity_embed_dim
RNN_HIDDEN_DIM = 32        # args.rnn_hidden_dim

OBS_DIM = OWN_OBS_DIM + N_ENEMIES * OBS_NF_EN + N_ALLIES * OBS_NF_AL        # 41
ACTION_SHAPE = N_ACTIONS_NO_ATTACK + N_ENEMIES                              # 9
WRAPPED_OWN_DIM = OWN_OBS_DIM + ID_LENGTH + N_ACTIONS_NO_ATTACK + 1         # 19
EN_FEAT_DIM = OBS_NF_EN + 1                                                 # 6

# ---- packed-input layout (lane offsets inside the single [B, PACKED_DIM] slab) ----
ALLY_BASE = WRAPPED_OWN_DIM                                                 # 19
ENEMY_BASE = ALLY_BASE + N_ALLIES * OBS_NF_AL                               # 37
PACKED_USED = ENEMY_BASE + N_ENEMIES * EN_FEAT_DIM                          # 55
PACKED_DIM = 64                                                             # zero-padded

# ---- fused-projection output layout (lane offsets inside the [tb, PROJ_OUT] result) ----
A = ATTN_EMBED_DIM
E = ENTITY_EMBED_DIM
N_ENT = N_ALLIES + N_ENEMIES            # 6
Q_OFF = 0                               # 0..15   query (already scaled by 1/sqrt(A))
OWN_OFF = Q_OFF + A                     # 16..31  own_value hidden
K_OFF = OWN_OFF + E                     # 32..127 keys   (ally0,1,2, enemy0,1,2)
V_OFF = K_OFF + N_ENT * A               # 128..223 values (same entity order)
PROJ_OUT = 256                          # lanes 224..255 zero padding (2 full lane groups)


# ---------------------------------- Pallas kernel ----------------------------------
def obs2feature_kernel(x_ref, wp_ref, bp_ref, w1_ref, b1_ref, w2_ref, b2_ref, out_ref):
    x = x_ref[...]                                                          # bf16 [TB, 64]
    # One fused block-diagonal projection (bf16 operands, f32 accumulate):
    #   [q_scaled | own_hidden | keys(6x16) | values(6x16) | pad]
    proj = jnp.dot(x, wp_ref[...], preferred_element_type=jnp.float32) + bp_ref[...]

    q = proj[:, Q_OFF:Q_OFF + A]                       # [TB, A], scale already folded in
    own_hidden = proj[:, OWN_OFF:OWN_OFF + E]          # [TB, E]

    # ---- stacked two-group softmax over all 6 entities (3 allies + 3 enemies) ----
    energies = []
    for e in range(N_ENT):
        k = proj[:, K_OFF + e * A: K_OFF + (e + 1) * A]
        energies.append(jnp.sum(q * k, axis=-1, keepdims=True))            # [TB, 1]
    energies = jnp.concatenate(energies, axis=-1)                           # [TB, 6]
    # Per-group softmax is invariant to any per-row shift, so one global row max
    # is enough (assumes the energy spread stays < ~80, true for any sane obs scale).
    m = jnp.max(energies, axis=-1, keepdims=True)
    p = jnp.exp(energies - m)                                               # single EUP push
    w_ally = p[:, :N_ALLIES] / jnp.sum(p[:, :N_ALLIES], axis=-1, keepdims=True)
    w_enemy = p[:, N_ALLIES:] / jnp.sum(p[:, N_ALLIES:], axis=-1, keepdims=True)

    def weighted_values(w, base, n_ent):
        out = w[:, 0:1] * proj[:, base:base + E]
        for e in range(1, n_ent):
            out = out + w[:, e:e + 1] * proj[:, base + e * E: base + (e + 1) * E]
        return out                                                          # [TB, E]

    ally_hidden = weighted_values(w_ally, V_OFF, N_ALLIES)
    enemy_hidden = weighted_values(w_enemy, V_OFF + N_ALLIES * E, N_ENEMIES)

    # ---- rnn MLP: one dot on the concatenated hidden, then the output projection ----
    tot = jnp.concatenate([own_hidden, ally_hidden, enemy_hidden], axis=-1)  # [TB, 3E]
    h = (jnp.dot(tot.astype(jnp.bfloat16), w1_ref[...],
                 preferred_element_type=jnp.float32) + b1_ref[...])
    h = jnp.maximum(h, 0.0)
    out = (jnp.dot(h.astype(jnp.bfloat16), w2_ref[...],
                   preferred_element_type=jnp.float32) + b2_ref[...])
    out_ref[...] = out.astype(out_ref.dtype)


def _round_up(x, m):
    return ((x + m - 1) // m) * m


def obs_action2feature_pallas(packed, fused_params, *, tb=2048):
    """packed: bf16 [B, PACKED_DIM] slab from preprocess()."""
    B = packed.shape[0]
    # Keep >= 2 grid steps where possible (v7x has 2 TensorCores); tile rows are a
    # multiple of 16 (bf16 sublane packing).
    tb = int(min(tb, max(_round_up(-(-B // 2), 16), 16)))
    grid_n = -(-B // tb)
    if grid_n > 1 and grid_n % 2 == 1:
        grid_n += 1                      # even step count -> neither v7x TC idles on a tail step
    B_pad = grid_n * tb
    if B_pad != B:
        packed = jnp.pad(packed, ((0, B_pad - B), (0, 0)))   # zero rows: harmless, sliced off

    wp, bp, w1, b1, w2, b2 = fused_params
    weights = (wp, bp, w1, b1, w2, b2)
    weight_specs = [pl.BlockSpec(w.shape, lambda i: (0, 0)) for w in weights]
    in_specs = [pl.BlockSpec((tb, PACKED_DIM), lambda i: (i, 0))] + weight_specs
    out_specs = pl.BlockSpec((tb, ENTITY_EMBED_DIM), lambda i: (i, 0))

    out = pl.pallas_call(
        obs2feature_kernel,
        out_shape=jax.ShapeDtypeStruct((B_pad, ENTITY_EMBED_DIM), jnp.float32),
        grid_spec=pltpu.PrefetchScalarGridSpec(
            num_scalar_prefetch=0,
            grid=(grid_n,),
            in_specs=in_specs,
            out_specs=out_specs,
        ),
        compiler_params=pltpu.CompilerParams(
            dimension_semantics=("parallel",),
            # headroom for tb sweeps up to ~8192; stays <= v7x's 64 MiB physical VMEM
            vmem_limit_bytes=32 * 1024 * 1024,
        ),
    )(packed, *weights)
    return out[:B]


# ---------------------------------- plain-JAX glue ----------------------------------
def binary_embed(n, length):
    return np.array([(n >> (length - 1 - k)) & 1 for k in range(length)], dtype=np.float32)


def preprocess(inputs):
    """Mirrors decompose_obs / decompose_action_info / concat of forward(), and packs
    everything into one lane-dense [B, PACKED_DIM] bf16 slab for the kernel."""
    bs_n_agents, seq_len, _ = inputs.shape
    B = bs_n_agents * seq_len
    flat = inputs.reshape(B, -1)
    obs = flat[:, :OBS_DIM]
    act = flat[:, OBS_DIM:OBS_DIM + ACTION_SHAPE]

    own_obs = obs[:, :OWN_OBS_DIM]
    enemy = obs[:, OWN_OBS_DIM:OWN_OBS_DIM + N_ENEMIES * OBS_NF_EN].reshape(B, N_ENEMIES, OBS_NF_EN)
    ally = obs[:, OWN_OBS_DIM + N_ENEMIES * OBS_NF_EN:].reshape(B, N_ALLIES, OBS_NF_AL)

    agent_ids = jnp.asarray(np.stack([binary_embed(i + 1, ID_LENGTH) for i in range(N_AGENTS)], 0))
    bs = B // N_AGENTS
    agent_id_inputs = jnp.tile(agent_ids, (bs, 1))                           # [B, id_len]

    attack_info = act[:, N_ACTIONS_NO_ATTACK:]                               # [B, n_en]
    compact = jnp.concatenate(
        [act[:, :N_ACTIONS_NO_ATTACK], attack_info.sum(-1, keepdims=True)], axis=-1)

    own_wrapped = jnp.concatenate([own_obs, agent_id_inputs, compact], axis=-1)      # [B, 19]
    enemy_feat = jnp.concatenate([enemy, attack_info[..., None]], axis=-1)           # [B, n_en, 6]

    packed = jnp.concatenate(
        [own_wrapped,
         ally.reshape(B, N_ALLIES * OBS_NF_AL),
         enemy_feat.reshape(B, N_ENEMIES * EN_FEAT_DIM)], axis=-1)                   # [B, 55]
    packed = jnp.pad(packed, ((0, 0), (0, PACKED_DIM - packed.shape[1])))            # [B, 64]
    packed = packed.astype(jnp.bfloat16)   # halves the dominant HBM stream; MXU is bf16 anyway

    # entity-major f32 views used by the references
    ally_em = jnp.transpose(ally, (1, 0, 2))                                         # [n_al, B, 6]
    enemy_em = jnp.transpose(enemy_feat, (1, 0, 2))                                  # [n_en, B, 6]
    return packed, own_wrapped, ally_em, enemy_em


def init_params(key):
    def lin(k, din, dout):
        kw, kb = jax.random.split(k)
        w = jax.random.normal(kw, (din, dout), jnp.float32) * (1.0 / np.sqrt(din))
        b = jax.random.normal(kb, (1, dout), jnp.float32) * 0.01
        return w, b

    keys = jax.random.split(key, 8)
    wq, bq = lin(keys[0], WRAPPED_OWN_DIM, ATTN_EMBED_DIM)       # self.query
    wka, bka = lin(keys[1], OBS_NF_AL, ATTN_EMBED_DIM)           # self.ally_key
    wva, bva = lin(keys[2], OBS_NF_AL, ENTITY_EMBED_DIM)         # self.ally_value
    wke, bke = lin(keys[3], EN_FEAT_DIM, ATTN_EMBED_DIM)         # self.enemy_key
    wve, bve = lin(keys[4], EN_FEAT_DIM, ENTITY_EMBED_DIM)       # self.enemy_value
    wvo, bvo = lin(keys[5], WRAPPED_OWN_DIM, ENTITY_EMBED_DIM)   # self.own_value
    w1, b1 = lin(keys[6], ENTITY_EMBED_DIM * 3, RNN_HIDDEN_DIM)  # rnn[0]
    w2, b2 = lin(keys[7], RNN_HIDDEN_DIM, ENTITY_EMBED_DIM)      # rnn[2]
    return [wq, bq, wka, bka, wva, bva, wke, bke, wve, bve, wvo, bvo, w1, b1, w2, b2]


def build_fused_params(params):
    """Host-side, one-time: block-diagonal fused projection weight/bias + MLP weights.
    Every transform is bf16-rounding-exact: block placement copies entries verbatim and
    the 1/sqrt(attn_dim)=0.25 query scale is an exact power of two."""
    (wq, bq, wka, bka, wva, bva, wke, bke, wve, bve, wvo, bvo, w1, b1, w2, b2) = [
        np.asarray(p, np.float32) for p in params]
    scale = np.float32(1.0 / np.sqrt(ATTN_EMBED_DIM))            # = 0.25 exactly

    Wp = np.zeros((PACKED_DIM, PROJ_OUT), np.float32)
    bp = np.zeros((1, PROJ_OUT), np.float32)

    Wp[:WRAPPED_OWN_DIM, Q_OFF:Q_OFF + A] = wq * scale
    bp[:, Q_OFF:Q_OFF + A] = bq * scale
    Wp[:WRAPPED_OWN_DIM, OWN_OFF:OWN_OFF + E] = wvo
    bp[:, OWN_OFF:OWN_OFF + E] = bvo
    for e in range(N_ALLIES):
        r0 = ALLY_BASE + e * OBS_NF_AL
        ck = K_OFF + e * A
        cv = V_OFF + e * E
        Wp[r0:r0 + OBS_NF_AL, ck:ck + A] = wka
        bp[:, ck:ck + A] = bka
        Wp[r0:r0 + OBS_NF_AL, cv:cv + E] = wva
        bp[:, cv:cv + E] = bva
    for e in range(N_ENEMIES):
        r0 = ENEMY_BASE + e * EN_FEAT_DIM
        ck = K_OFF + (N_ALLIES + e) * A
        cv = V_OFF + (N_ALLIES + e) * E
        Wp[r0:r0 + EN_FEAT_DIM, ck:ck + A] = wke
        bp[:, ck:ck + A] = bke
        Wp[r0:r0 + EN_FEAT_DIM, cv:cv + E] = wve
        bp[:, cv:cv + E] = bve

    return [jnp.asarray(Wp, jnp.bfloat16), jnp.asarray(bp, jnp.float32),
            jnp.asarray(w1, jnp.bfloat16), jnp.asarray(b1, jnp.float32),
            jnp.asarray(w2, jnp.bfloat16), jnp.asarray(b2, jnp.float32)]


def reference(own_wrapped, ally_em, enemy_em, params, *, bf16_operands=False):
    """Independent (non-fused) implementation of the module's forward.
    bf16_operands=True rounds exactly the tensors the kernel rounds (matmul operands)
    but computes everything else in exact f32, giving a tight check of the kernel."""
    HI = jax.lax.Precision.HIGHEST
    r = (lambda t: t.astype(jnp.bfloat16).astype(jnp.float32)) if bf16_operands else (lambda t: t)
    (wq, bq, wka, bka, wva, bva, wke, bke, wve, bve, wvo, bvo, w1, b1, w2, b2) = params

    ow = r(own_wrapped)
    own_hidden = jnp.matmul(ow, r(wvo), precision=HI) + bvo
    q = jnp.matmul(ow, r(wq), precision=HI) + bq

    def attn_ref(feats_em, wk, bk, wv, bv):
        keys = jnp.matmul(r(feats_em), r(wk), precision=HI) + bk      # [n_ent, B, A]
        vals = jnp.matmul(r(feats_em), r(wv), precision=HI) + bv      # [n_ent, B, E]
        k = jnp.transpose(keys, (1, 2, 0))                            # [B, A, n_ent]
        v = jnp.transpose(vals, (1, 0, 2))                            # [B, n_ent, E]
        energy = jnp.einsum('ba,ban->bn',
                            q / jnp.sqrt(jnp.float32(ATTN_EMBED_DIM)), k, precision=HI)
        score = jax.nn.softmax(energy, axis=-1)
        return jnp.einsum('bn,bne->be', score, v, precision=HI)

    ally_hidden = attn_ref(ally_em, wka, bka, wva, bva)
    enemy_hidden = attn_ref(enemy_em, wke, bke, wve, bve)
    tot = jnp.concatenate([own_hidden, ally_hidden, enemy_hidden], axis=-1)
    h = jax.nn.relu(jnp.matmul(r(tot), r(w1), precision=HI) + b1)
    return jnp.matmul(r(h), r(w2), precision=HI) + b2


if __name__ == "__main__":
    key = jax.random.PRNGKey(0)
    k_obs, k_act, k_par = jax.random.split(key, 3)

    BS_N_AGENTS = 8       # bs(=2) * n_agents(=4)
    SEQ_LEN = 8
    B = BS_N_AGENTS * SEQ_LEN

    obs_part = jax.random.normal(k_obs, (BS_N_AGENTS, SEQ_LEN, OBS_DIM), jnp.float32)
    act_idx = jax.random.randint(k_act, (BS_N_AGENTS, SEQ_LEN), 0, ACTION_SHAPE)
    act_part = jax.nn.one_hot(act_idx, ACTION_SHAPE, dtype=jnp.float32)
    inputs = jnp.concatenate([obs_part, act_part], axis=-1)     # [8, 8, 50]

    params = init_params(k_par)
    packed, own_wrapped, ally_em, enemy_em = preprocess(inputs)
    fused = build_fused_params(params)

    out = obs_action2feature_pallas(packed, fused, tb=2048)
    out = jax.block_until_ready(out)
    assert out.shape == (B, ENTITY_EMBED_DIM)

    # Tight check: same bf16-rounded matmul operands, exact f32 math elsewhere.
    ref_bf16 = reference(own_wrapped, ally_em, enemy_em, params, bf16_operands=True)
    err_bf16 = float(jnp.max(jnp.abs(out - ref_bf16)))
    assert jnp.allclose(out, ref_bf16, atol=2e-3, rtol=2e-3), err_bf16

    # Loose sanity check vs. the pure-f32 module: only bf16 operand rounding remains
    # (expected ~0.5% relative); anything larger would indicate a real bug.
    ref_f32 = reference(own_wrapped, ally_em, enemy_em, params, bf16_operands=False)
    err_f32 = float(jnp.max(jnp.abs(out - ref_f32)))
    assert err_f32 < 0.25, err_f32

    print("KERNEL_OK")
</pallas_src>

<mosaic_0001>
module attributes {stable_mosaic.version = 11 : i64} {
  func.func @obs2feature_kernel(%arg0: i32, %arg1: memref<32x64xbf16, #tpu.memory_space<vmem>>, %arg2: memref<64x256xbf16, #tpu.memory_space<vmem>>, %arg3: memref<1x256xf32, #tpu.memory_space<vmem>>, %arg4: memref<48x32xbf16, #tpu.memory_space<vmem>>, %arg5: memref<1x32xf32, #tpu.memory_space<vmem>>, %arg6: memref<32x16xbf16, #tpu.memory_space<vmem>>, %arg7: memref<1x16xf32, #tpu.memory_space<vmem>>, %arg8: memref<32x16xf32, #tpu.memory_space<vmem>>) attributes {dimension_semantics = [#tpu.dimension_semantics<parallel>], iteration_bounds = array<i64: 2>, scalar_prefetch = 0 : i64, scratch_operands = 0 : i64, tpu.core_type = #tpu.core_type<tc>, window_params = [{transform_indices = @transform_0, window_bounds = array<i64: 32, 64>}, {pipeline_mode = #tpu.pipeline_mode<synchronous>, transform_indices = @transform_1, window_bounds = array<i64: 64, 256>}, {pipeline_mode = #tpu.pipeline_mode<synchronous>, transform_indices = @transform_2, window_bounds = array<i64: 1, 256>}, {pipeline_mode = #tpu.pipeline_mode<synchronous>, transform_indices = @transform_3, window_bounds = array<i64: 48, 32>}, {pipeline_mode = #tpu.pipeline_mode<synchronous>, transform_indices = @transform_4, window_bounds = array<i64: 1, 32>}, {pipeline_mode = #tpu.pipeline_mode<synchronous>, transform_indices = @transform_5, window_bounds = array<i64: 32, 16>}, {pipeline_mode = #tpu.pipeline_mode<synchronous>, transform_indices = @transform_6, window_bounds = array<i64: 1, 16>}, {transform_indices = @transform_7, window_bounds = array<i64: 32, 16>}]} {
    %c0 = arith.constant 0 : index
    %c0_0 = arith.constant 0 : index
    %0 = vector.load %arg1[%c0, %c0_0] : memref<32x64xbf16, #tpu.memory_space<vmem>>, vector<32x64xbf16>
    %c0_1 = arith.constant 0 : index
    %c0_2 = arith.constant 0 : index
    %1 = vector.load %arg2[%c0_1, %c0_2] : memref<64x256xbf16, #tpu.memory_space<vmem>>, vector<64x256xbf16>
    %cst = arith.constant dense<0.000000e+00> : vector<32x256xf32>
    %2 = tpu.matmul %0, %1, %cst {dimension_numbers = #tpu.dot_dimension_numbers<[1], [0], [0], [1], [0, 0, 1, 1], [], []>} : vector<32x64xbf16>, vector<64x256xbf16>, vector<32x256xf32> -> vector<32x256xf32>
    %c0_3 = arith.constant 0 : index
    %c0_4 = arith.constant 0 : index
    %3 = vector.load %arg3[%c0_3, %c0_4] : memref<1x256xf32, #tpu.memory_space<vmem>>, vector<1x256xf32>
    %4 = vector.broadcast %3 : vector<1x256xf32> to vector<32x256xf32>
    %5 = arith.addf %2, %4 : vector<32x256xf32>
    %6 = vector.extract_strided_slice %5 {offsets = [0, 0], sizes = [32, 16], strides = [1, 1]} : vector<32x256xf32> to vector<32x16xf32>
    %7 = vector.extract_strided_slice %5 {offsets = [0, 16], sizes = [32, 16], strides = [1, 1]} : vector<32x256xf32> to vector<32x16xf32>
    %8 = vector.extract_strided_slice %5 {offsets = [0, 32], sizes = [32, 16], strides = [1, 1]} : vector<32x256xf32> to vector<32x16xf32>
    %9 = arith.mulf %6, %8 : vector<32x16xf32>
    %cst_5 = arith.constant dense<0.000000e+00> : vector<32xf32>
    %10 = vector.multi_reduction <add>, %9, %cst_5 [1] : vector<32x16xf32> to vector<32xf32>
    %11 = vector.shape_cast %10 : vector<32xf32> to vector<32x1xf32>
    %12 = vector.extract_strided_slice %5 {offsets = [0, 48], sizes = [32, 16], strides = [1, 1]} : vector<32x256xf32> to vector<32x16xf32>
    %13 = arith.mulf %6, %12 : vector<32x16xf32>
    %cst_6 = arith.constant dense<0.000000e+00> : vector<32xf32>
    %14 = vector.multi_reduction <add>, %13, %cst_6 [1] : vector<32x16xf32> to vector<32xf32>
    %15 = vector.shape_cast %14 : vector<32xf32> to vector<32x1xf32>
    %16 = vector.extract_strided_slice %5 {offsets = [0, 64], sizes = [32, 16], strides = [1, 1]} : vector<32x256xf32> to vector<32x16xf32>
    %17 = arith.mulf %6, %16 : vector<32x16xf32>
    %cst_7 = arith.constant dense<0.000000e+00> : vector<32xf32>
    %18 = vector.multi_reduction <add>, %17, %cst_7 [1] : vector<32x16xf32> to vector<32xf32>
    %19 = vector.shape_cast %18 : vector<32xf32> to vector<32x1xf32>
    %20 = vector.extract_strided_slice %5 {offsets = [0, 80], sizes = [32, 16], strides = [1, 1]} : vector<32x256xf32> to vector<32x16xf32>
    %21 = arith.mulf %6, %20 : vector<32x16xf32>
    %cst_8 = arith.constant dense<0.000000e+00> : vector<32xf32>
    %22 = vector.multi_reduction <add>, %21, %cst_8 [1] : vector<32x16xf32> to vector<32xf32>
    %23 = vector.shape_cast %22 : vector<32xf32> to vector<32x1xf32>
    %24 = vector.extract_strided_slice %5 {offsets = [0, 96], sizes = [32, 16], strides = [1, 1]} : vector<32x256xf32> to vector<32x16xf32>
    %25 = arith.mulf %6, %24 : vector<32x16xf32>
    %cst_9 = arith.constant dense<0.000000e+00> : vector<32xf32>
    %26 = vector.multi_reduction <add>, %25, %cst_9 [1] : vector<32x16xf32> to vector<32xf32>
    %27 = vector.shape_cast %26 : vector<32xf32> to vector<32x1xf32>
    %28 = vector.extract_strided_slice %5 {offsets = [0, 112], sizes = [32, 16], strides = [1, 1]} : vector<32x256xf32> to vector<32x16xf32>
    %29 = arith.mulf %6, %28 : vector<32x16xf32>
    %cst_10 = arith.constant dense<0.000000e+00> : vector<32xf32>
    %30 = vector.multi_reduction <add>, %29, %cst_10 [1] : vector<32x16xf32> to vector<32xf32>
    %31 = vector.shape_cast %30 : vector<32xf32> to vector<32x1xf32>
    %32 = tpu.concatenate %11, %15, %19, %23, %27, %31 in 1 : vector<32x1xf32>, vector<32x1xf32>, vector<32x1xf32>, vector<32x1xf32>, vector<32x1xf32>, vector<32x1xf32> -> vector<32x6xf32>
    %cst_11 = arith.constant dense<0xFF800000> : vector<32xf32>
    %33 = vector.multi_reduction <maximumf>, %32, %cst_11 [1] : vector<32x6xf32> to vector<32xf32>
    %34 = vector.shape_cast %33 : vector<32xf32> to vector<32x1xf32>
    %35 = vector.broadcast %34 : vector<32x1xf32> to vector<32x6xf32>
    %36 = arith.subf %32, %35 : vector<32x6xf32>
    %37 = math.exp %36 : vector<32x6xf32>
    %38 = vector.extract_strided_slice %37 {offsets = [0, 0], sizes = [32, 3], strides = [1, 1]} : vector<32x6xf32> to vector<32x3xf32>
    %39 = vector.extract_strided_slice %37 {offsets = [0, 0], sizes = [32, 3], strides = [1, 1]} : vector<32x6xf32> to vector<32x3xf32>
    %cst_12 = arith.constant dense<0.000000e+00> : vector<32xf32>
    %40 = vector.multi_reduction <add>, %39, %cst_12 [1] : vector<32x3xf32> to vector<32xf32>
    %41 = vector.shape_cast %40 : vector<32xf32> to vector<32x1xf32>
    %42 = vector.broadcast %41 : vector<32x1xf32> to vector<32x3xf32>
    %43 = arith.divf %38, %42 : vector<32x3xf32>
    %44 = vector.extract_strided_slice %37 {offsets = [0, 3], sizes = [32, 3], strides = [1, 1]} : vector<32x6xf32> to vector<32x3xf32>
    %45 = vector.extract_strided_slice %37 {offsets = [0, 3], sizes = [32, 3], strides = [1, 1]} : vector<32x6xf32> to vector<32x3xf32>
    %cst_13 = arith.constant dense<0.000000e+00> : vector<32xf32>
    %46 = vector.multi_reduction <add>, %45, %cst_13 [1] : vector<32x3xf32> to vector<32xf32>
    %47 = vector.shape_cast %46 : vector<32xf32> to vector<32x1xf32>
    %48 = vector.broadcast %47 : vector<32x1xf32> to vector<32x3xf32>
    %49 = arith.divf %44, %48 : vector<32x3xf32>
    %50 = vector.extract_strided_slice %43 {offsets = [0, 0], sizes = [32, 1], strides = [1, 1]} : vector<32x3xf32> to vector<32x1xf32>
    %51 = vector.extract_strided_slice %5 {offsets = [0, 128], sizes = [32, 16], strides = [1, 1]} : vector<32x256xf32> to vector<32x16xf32>
    %52 = vector.broadcast %50 : vector<32x1xf32> to vector<32x16xf32>
    %53 = arith.mulf %52, %51 : vector<32x16xf32>
    %54 = vector.extract_strided_slice %43 {offsets = [0, 1], sizes = [32, 1], strides = [1, 1]} : vector<32x3xf32> to vector<32x1xf32>
    %55 = vector.extract_strided_slice %5 {offsets = [0, 144], sizes = [32, 16], strides = [1, 1]} : vector<32x256xf32> to vector<32x16xf32>
    %56 = vector.broadcast %54 : vector<32x1xf32> to vector<32x16xf32>
    %57 = arith.mulf %56, %55 : vector<32x16xf32>
    %58 = arith.addf %53, %57 : vector<32x16xf32>
    %59 = vector.extract_strided_slice %43 {offsets = [0, 2], sizes = [32, 1], strides = [1, 1]} : vector<32x3xf32> to vector<32x1xf32>
    %60 = vector.extract_strided_slice %5 {offsets = [0, 160], sizes = [32, 16], strides = [1, 1]} : vector<32x256xf32> to vector<32x16xf32>
    %61 = vector.broadcast %59 : vector<32x1xf32> to vector<32x16xf32>
    %62 = arith.mulf %61, %60 : vector<32x16xf32>
    %63 = arith.addf %58, %62 : vector<32x16xf32>
    %64 = vector.extract_strided_slice %49 {offsets = [0, 0], sizes = [32, 1], strides = [1, 1]} : vector<32x3xf32> to vector<32x1xf32>
    %65 = vector.extract_strided_slice %5 {offsets = [0, 176], sizes = [32, 16], strides = [1, 1]} : vector<32x256xf32> to vector<32x16xf32>
    %66 = vector.broadcast %64 : vector<32x1xf32> to vector<32x16xf32>
    %67 = arith.mulf %66, %65 : vector<32x16xf32>
    %68 = vector.extract_strided_slice %49 {offsets = [0, 1], sizes = [32, 1], strides = [1, 1]} : vector<32x3xf32> to vector<32x1xf32>
    %69 = vector.extract_strided_slice %5 {offsets = [0, 192], sizes = [32, 16], strides = [1, 1]} : vector<32x256xf32> to vector<32x16xf32>
    %70 = vector.broadcast %68 : vector<32x1xf32> to vector<32x16xf32>
    %71 = arith.mulf %70, %69 : vector<32x16xf32>
    %72 = arith.addf %67, %71 : vector<32x16xf32>
    %73 = vector.extract_strided_slice %49 {offsets = [0, 2], sizes = [32, 1], strides = [1, 1]} : vector<32x3xf32> to vector<32x1xf32>
    %74 = vector.extract_strided_slice %5 {offsets = [0, 208], sizes = [32, 16], strides = [1, 1]} : vector<32x256xf32> to vector<32x16xf32>
    %75 = vector.broadcast %73 : vector<32x1xf32> to vector<32x16xf32>
    %76 = arith.mulf %75, %74 : vector<32x16xf32>
    %77 = arith.addf %72, %76 : vector<32x16xf32>
    %78 = tpu.concatenate %7, %63, %77 in 1 : vector<32x16xf32>, vector<32x16xf32>, vector<32x16xf32> -> vector<32x48xf32>
    %79 = arith.truncf %78 : vector<32x48xf32> to vector<32x48xbf16>
    %c0_14 = arith.constant 0 : index
    %c0_15 = arith.constant 0 : index
    %80 = vector.load %arg4[%c0_14, %c0_15] : memref<48x32xbf16, #tpu.memory_space<vmem>>, vector<48x32xbf16>
    %cst_16 = arith.constant dense<0.000000e+00> : vector<32x32xf32>
    %81 = tpu.matmul %79, %80, %cst_16 {dimension_numbers = #tpu.dot_dimension_numbers<[1], [0], [0], [1], [0, 0, 1, 1], [], []>} : vector<32x48xbf16>, vector<48x32xbf16>, vector<32x32xf32> -> vector<32x32xf32>
    %c0_17 = arith.constant 0 : index
    %c0_18 = arith.constant 0 : index
    %82 = vector.load %arg5[%c0_17, %c0_18] : memref<1x32xf32, #tpu.memory_space<vmem>>, vector<1x32xf32>
    %83 = vector.broadcast %82 : vector<1x32xf32> to vector<32x32xf32>
    %84 = arith.addf %81, %83 : vector<32x32xf32>
    %cst_19 = arith.constant 0.000000e+00 : f32
    %85 = vector.broadcast %cst_19 : f32 to vector<32x32xf32>
    %86 = arith.maximumf %84, %85 : vector<32x32xf32>
    %87 = arith.truncf %86 : vector<32x32xf32> to vector<32x32xbf16>
    %c0_20 = arith.constant 0 : index
    %c0_21 = arith.constant 0 : index
    %88 = vector.load %arg6[%c0_20, %c0_21] : memref<32x16xbf16, #tpu.memory_space<vmem>>, vector<32x16xbf16>
    %cst_22 = arith.constant dense<0.000000e+00> : vector<32x16xf32>
    %89 = tpu.matmul %87, %88, %cst_22 {dimension_numbers = #tpu.dot_dimension_numbers<[1], [0], [0], [1], [0, 0, 1, 1], [], []>} : vector<32x32xbf16>, vector<32x16xbf16>, vector<32x16xf32> -> vector<32x16xf32>
    %c0_23 = arith.constant 0 : index
    %c0_24 = arith.constant 0 : index
    %90 = vector.load %arg7[%c0_23, %c0_24] : memref<1x16xf32, #tpu.memory_space<vmem>>, vector<1x16xf32>
    %91 = vector.broadcast %90 : vector<1x16xf32> to vector<32x16xf32>
    %92 = arith.addf %89, %91 : vector<32x16xf32>
    %c0_25 = arith.constant 0 : index
    %c0_26 = arith.constant 0 : index
    %93 = vector.load %arg8[%c0_25, %c0_26] : memref<32x16xf32, #tpu.memory_space<vmem>>, vector<32x16xf32>
    tpu.vector_store %arg8[%c0_25, %c0_26], %92 {strides = array<i32>} : memref<32x16xf32, #tpu.memory_space<vmem>>, vector<32x16xf32>,
    return
  }
  func.func @transform_0(%arg0: i32) -> (i32, i32) {
    %c0_i32 = arith.constant 0 : i32
    %c0_i32_0 = arith.constant 0 : i32
    return %arg0, %c0_i32 : i32, i32
  }
  func.func @transform_1(%arg0: i32) -> (i32, i32) {
    %c0_i32 = arith.constant 0 : i32
    %c0_i32_0 = arith.constant 0 : i32
    %c0_i32_1 = arith.constant 0 : i32
    return %c0_i32, %c0_i32_0 : i32, i32
  }
  func.func @transform_2(%arg0: i32) -> (i32, i32) {
    %c0_i32 = arith.constant 0 : i32
    %c0_i32_0 = arith.constant 0 : i32
    %c0_i32_1 = arith.constant 0 : i32
    return %c0_i32, %c0_i32_0 : i32, i32
  }
  func.func @transform_3(%arg0: i32) -> (i32, i32) {
    %c0_i32 = arith.constant 0 : i32
    %c0_i32_0 = arith.constant 0 : i32
    %c0_i32_1 = arith.constant 0 : i32
    return %c0_i32, %c0_i32_0 : i32, i32
  }
  func.func @transform_4(%arg0: i32) -> (i32, i32) {
    %c0_i32 = arith.constant 0 : i32
    %c0_i32_0 = arith.constant 0 : i32
    %c0_i32_1 = arith.constant 0 : i32
    return %c0_i32, %c0_i32_0 : i32, i32
  }
  func.func @transform_5(%arg0: i32) -> (i32, i32) {
    %c0_i32 = arith.constant 0 : i32
    %c0_i32_0 = arith.constant 0 : i32
    %c0_i32_1 = arith.constant 0 : i32
    return %c0_i32, %c0_i32_0 : i32, i32
  }
  func.func @transform_6(%arg0: i32) -> (i32, i32) {
    %c0_i32 = arith.constant 0 : i32
    %c0_i32_0 = arith.constant 0 : i32
    %c0_i32_1 = arith.constant 0 : i32
    return %c0_i32, %c0_i32_0 : i32, i32
  }
  func.func @transform_7(%arg0: i32) -> (i32, i32) {
    %c0_i32 = arith.constant 0 : i32
    %c0_i32_0 = arith.constant 0 : i32
    return %arg0, %c0_i32 : i32, i32
  }
}

</mosaic_0001>

<llo_original>
// kernel: tpu_custom_call.1
$region0: #{tpu_custom_call.1}
  #allocation0 [shape = 'u32[]', space=smem, size = 0x4, offset = 0x4, fixed_abs, tag = 'smem constant byte address 0x4 - core index']
  #allocation1 [shape = 'u32[144,128]{1,0:T(1,128)}', space=vmem, size = 0x12000, scoped, tag = 'internal scratch']
  %s0 = inlined_call_operand.hbm [shape: bf16[64,64], index: 0, kind: input, shape index: {}]
  %s1 = inlined_call_operand.vmem [shape: bf16[64,256], index: 1, kind: input, shape index: {}]
  %s2 = inlined_call_operand.vmem [shape: f32[1,256], index: 2, kind: input, shape index: {}]
  %s3 = inlined_call_operand.vmem [shape: bf16[48,32], index: 3, kind: input, shape index: {}]
  %s4 = inlined_call_operand.vmem [shape: f32[1,32], index: 4, kind: input, shape index: {}]
  %s5 = inlined_call_operand.vmem [shape: bf16[32,16], index: 5, kind: input, shape index: {}]
  %s6 = inlined_call_operand.vmem [shape: f32[1,16], index: 6, kind: input, shape index: {}]
  %s7 = inlined_call_operand.vmem [shape: f32[64,16], index: 7, kind: output, shape index: {}]
  %s8 = sld [smem:[#allocation0]]
  $region65: #{tpu_custom_call.1} parent=0
    _
  %s10 = ssub.s32 1, %s8
  %s11 = scalar_select 0, %s10, %s8
  $region1: #{tpu_custom_call.1} parent=0
    #allocation2 [shape = 'u8[16384]{0}', space=vmem, size = 0x4000, scoped, tag = 'input window, operand 0']
    #allocation3 [shape = 's32[2]{0}', space=sflag, size = 0x8, scoped, tag = 'scoped memory for tpu_custom_call.1']
    %12 = vsyncpa [#allocation3], 0
    %s13 = scalar_lea.sflag [#allocation3], 1
    %14 = vsyncpa %s13, 0
    loop: start=0, step=1, limit=4
    $region2: #{tpu_custom_call.1} parent=1 // loop_pre_header
      _
    $region3: #{tpu_custom_call.1} parent=1 // loop_header
      %s16 = sphi 0, %s20
      %p17 = scmp.ge.s32.totalorder %s16, 4
      %s26 = sphi 0, %s28
      %s29 = sphi 0, %s26
      %s30 = sphi 0, %s29
      %s46 = sphi 0, %s30
      %s50 = sphi 0, %s50
      %s52 = sphi 0, %s50
      %s53 = sphi 0, %s52
      %s67 = sphi 0, %s53
      %s71 = sphi 0, %s71
      %s73 = sphi 0, %s71
      %s74 = sphi 0, %s73
      %s88 = sphi 0, %s74
      %s92 = sphi 0, %s92
      %s94 = sphi 0, %s92
      %s95 = sphi 0, %s94
      %s109 = sphi 0, %s95
      %s113 = sphi 0, %s113
      %s115 = sphi 0, %s113
      %s116 = sphi 0, %s115
      %s130 = sphi 0, %s116
      %s134 = sphi 0, %s134
      %s136 = sphi 0, %s134
      %s137 = sphi 0, %s136
      %s151 = sphi 0, %s137
      %s155 = sphi 0, %s155
      %s157 = sphi 0, %s155
      %s158 = sphi 0, %s157
      %s172 = sphi 0, %s158
      %s178 = sphi 0, %s180
      %s181 = sphi 0, %s178
      %s182 = sphi 0, %s181
      %s198 = sphi 0, %s182
    $region4: #{tpu_custom_call.1} parent=1 // loop_header_branch
      %19 = sbr.rel (%p17) target = $region8
    $region5: #{tpu_custom_call.1} parent=1 // loop_body
      %s21 = ssub.s32 %s16, 1
      %s22 = ssub.s32 %s16, 2
      %s23 = sadd.s32 %s16, 1
      %s24 = ssub.s32 %s16, %s23
      %p25 = scmp.eq.s32.totalorder %s24, 0
      %s27 = sadd.s32 %s26, 1
      %s28 = scalar_select %p25, %s26, %s27
      %p31 = pneg %p25
      %p32 = scmp.eq.s32.totalorder %s16, 1
      %p33 = por %p31, %p32
      %p34 = scmp.ne.s32.totalorder %s26, %s29
      %p35 = scmp.eq.s32.totalorder %s16, 0
      %p36 = por %p34, %p35
      %p37 = scmp.ne.s32.totalorder %s26, %s29
      %p38 = scmp.eq.s32.totalorder %s21, 1
      %p39 = por %p37, %p38
      %p40 = scmp.ne.s32.totalorder %s29, %s30
      %p41 = scmp.eq.s32.totalorder %s21, 0
      %p42 = por %p40, %p41
      %p43 = scmp.ne.s32.totalorder %s29, %s30
      %p44 = scmp.eq.s32.totalorder %s22, 1
      %p45 = por %p43, %p44
      %p47 = scmp.ne.s32.totalorder %s30, %s46
      %p48 = scmp.eq.s32.totalorder %s22, 0
      %p49 = por %p47, %p48
      %s51 = sadd.s32 %s50, 1
      %p54 = scmp.eq.s32.totalorder %s16, 1
      %p55 = scmp.ne.s32.totalorder %s50, %s52
      %p56 = scmp.eq.s32.totalorder %s16, 0
      %p57 = por %p55, %p56
      %p58 = scmp.ne.s32.totalorder %s50, %s52
      %p59 = scmp.eq.s32.totalorder %s21, 1
      %p60 = por %p58, %p59
      %p61 = scmp.ne.s32.totalorder %s52, %s53
      %p62 = scmp.eq.s32.totalorder %s21, 0
      %p63 = por %p61, %p62
      %p64 = scmp.ne.s32.totalorder %s52, %s53
      %p65 = scmp.eq.s32.totalorder %s22, 1
      %p66 = por %p64, %p65
      %p68 = scmp.ne.s32.totalorder %s53, %s67
      %p69 = scmp.eq.s32.totalorder %s22, 0
      %p70 = por %p68, %p69
      %s72 = sadd.s32 %s71, 1
      %p75 = scmp.eq.s32.totalorder %s16, 1
      %p76 = scmp.ne.s32.totalorder %s71, %s73
      %p77 = scmp.eq.s32.totalorder %s16, 0
      %p78 = por %p76, %p77
      %p79 = scmp.ne.s32.totalorder %s71, %s73
      %p80 = scmp.eq.s32.totalorder %s21, 1
      %p81 = por %p79, %p80
      %p82 = scmp.ne.s32.totalorder %s73, %s74
      %p83 = scmp.eq.s32.totalorder %s21, 0
      %p84 = por %p82, %p83
      %p85 = scmp.ne.s32.totalorder %s73, %s74
      %p86 = scmp.eq.s32.totalorder %s22, 1
      %p87 = por %p85, %p86
      %p89 = scmp.ne.s32.totalorder %s74, %s88
      %p90 = scmp.eq.s32.totalorder %s22, 0
      %p91 = por %p89, %p90
      %s93 = sadd.s32 %s92, 1
      %p96 = scmp.eq.s32.totalorder %s16, 1
      %p97 = scmp.ne.s32.totalorder %s92, %s94
      %p98 = scmp.eq.s32.totalorder %s16, 0
      %p99 = por %p97, %p98
      %p100 = scmp.ne.s32.totalorder %s92, %s94
      %p101 = scmp.eq.s32.totalorder %s21, 1
      %p102 = por %p100, %p101
      %p103 = scmp.ne.s32.totalorder %s94, %s95
      %p104 = scmp.eq.s32.totalorder %s21, 0
      %p105 = por %p103, %p104
      %p106 = scmp.ne.s32.totalorder %s94, %s95
      %p107 = scmp.eq.s32.totalorder %s22, 1
      %p108 = por %p106, %p107
      %p110 = scmp.ne.s32.totalorder %s95, %s109
      %p111 = scmp.eq.s32.totalorder %s22, 0
      %p112 = por %p110, %p111
      %s114 = sadd.s32 %s113, 1
      %p117 = scmp.eq.s32.totalorder %s16, 1
      %p118 = scmp.ne.s32.totalorder %s113, %s115
      %p119 = scmp.eq.s32.totalorder %s16, 0
      %p120 = por %p118, %p119
      %p121 = scmp.ne.s32.totalorder %s113, %s115
      %p122 = scmp.eq.s32.totalorder %s21, 1
      %p123 = por %p121, %p122
      %p124 = scmp.ne.s32.totalorder %s115, %s116
      %p125 = scmp.eq.s32.totalorder %s21, 0
      %p126 = por %p124, %p125
      %p127 = scmp.ne.s32.totalorder %s115, %s116
      %p128 = scmp.eq.s32.totalorder %s22, 1
      %p129 = por %p127, %p128
      %p131 = scmp.ne.s32.totalorder %s116, %s130
      %p132 = scmp.eq.s32.totalorder %s22, 0
      %p133 = por %p131, %p132
      %s135 = sadd.s32 %s134, 1
      %p138 = scmp.eq.s32.totalorder %s16, 1
      %p139 = scmp.ne.s32.totalorder %s134, %s136
      %p140 = scmp.eq.s32.totalorder %s16, 0
      %p141 = por %p139, %p140
      %p142 = scmp.ne.s32.totalorder %s134, %s136
      %p143 = scmp.eq.s32.totalorder %s21, 1
      %p144 = por %p142, %p143
      %p145 = scmp.ne.s32.totalorder %s136, %s137
      %p146 = scmp.eq.s32.totalorder %s21, 0
      %p147 = por %p145, %p146
      %p148 = scmp.ne.s32.totalorder %s136, %s137
      %p149 = scmp.eq.s32.totalorder %s22, 1
      %p150 = por %p148, %p149
      %p152 = scmp.ne.s32.totalorder %s137, %s151
      %p153 = scmp.eq.s32.totalorder %s22, 0
      %p154 = por %p152, %p153
      %s156 = sadd.s32 %s155, 1
      %p159 = scmp.eq.s32.totalorder %s16, 1
      %p160 = scmp.ne.s32.totalorder %s155, %s157
      %p161 = scmp.eq.s32.totalorder %s16, 0
      %p162 = por %p160, %p161
      %p163 = scmp.ne.s32.totalorder %s155, %s157
      %p164 = scmp.eq.s32.totalorder %s21, 1
      %p165 = por %p163, %p164
      %p166 = scmp.ne.s32.totalorder %s157, %s158
      %p167 = scmp.eq.s32.totalorder %s21, 0
      %p168 = por %p166, %p167
      %p169 = scmp.ne.s32.totalorder %s157, %s158
      %p170 = scmp.eq.s32.totalorder %s22, 1
      %p171 = por %p169, %p170
      %p173 = scmp.ne.s32.totalorder %s158, %s172
      %p174 = scmp.eq.s32.totalorder %s22, 0
      %p175 = por %p173, %p174
      %s176 = ssub.s32 %s16, %s23
      %p177 = scmp.eq.s32.totalorder %s176, 0
      %s179 = sadd.s32 %s178, 1
      %s180 = scalar_select %p177, %s178, %s179
      %p183 = pneg %p177
      %p184 = scmp.eq.s32.totalorder %s16, 1
      %p185 = por %p183, %p184
      %p186 = scmp.ne.s32.totalorder %s178, %s181
      %p187 = scmp.eq.s32.totalorder %s16, 0
      %p188 = por %p186, %p187
      %p189 = scmp.ne.s32.totalorder %s178, %s181
      %p190 = scmp.eq.s32.totalorder %s21, 1
      %p191 = por %p189, %p190
      %p192 = scmp.ne.s32.totalorder %s181, %s182
      %p193 = scmp.eq.s32.totalorder %s21, 0
      %p194 = por %p192, %p193
      %p195 = scmp.ne.s32.totalorder %s181, %s182
      %p196 = scmp.eq.s32.totalorder %s22, 1
      %p197 = por %p195, %p196
      %p199 = scmp.ne.s32.totalorder %s182, %s198
      %p200 = scmp.eq.s32.totalorder %s22, 0
      %p201 = por %p199, %p200
      %p202 = scmp.le.s32.totalorder 1, %s16
      %p203 = scmp.lt.s32.totalorder %s16, 3
      %p204 = pnand %p202, %p203
      %p205 = pneg %p204
      // Predicated region
      $region9: #{tpu_custom_call.1} parent=5 // pred_check
        _
      $region10: #{tpu_custom_call.1} parent=5 // pred_check_branch
        %207 = sbr.rel (%p204) target = $region12
      $region11: #{tpu_custom_call.1} parent=5 // pred_region
        %s208 = ssub.s32 %s16, 1
        // Predicated region
        $region13: #{tpu_custom_call.1} parent=11 // pred_check
          %p209 = pneg %p63
        $region14: #{tpu_custom_call.1} parent=11 // pred_check_branch
          %211 = sbr.rel (%p209) target = $region16
        $region15: #{tpu_custom_call.1} parent=11 // pred_region
          _
        $region16: #{tpu_custom_call.1} parent=11 // pred_fallthru
          _
        // Predicated region
        $region17: #{tpu_custom_call.1} parent=11 // pred_check
          %p212 = pneg %p84
        $region18: #{tpu_custom_call.1} parent=11 // pred_check_branch
          %214 = sbr.rel (%p212) target = $region20
        $region19: #{tpu_custom_call.1} parent=11 // pred_region
          _
        $region20: #{tpu_custom_call.1} parent=11 // pred_fallthru
          _
        // Predicated region
        $region21: #{tpu_custom_call.1} parent=11 // pred_check
          %p215 = pneg %p105
        $region22: #{tpu_custom_call.1} parent=11 // pred_check_branch
          %217 = sbr.rel (%p215) target = $region24
        $region23: #{tpu_custom_call.1} parent=11 // pred_region
          _
        $region24: #{tpu_custom_call.1} parent=11 // pred_fallthru
          _
        // Predicated region
        $region25: #{tpu_custom_call.1} parent=11 // pred_check
          %p218 = pneg %p126
        $region26: #{tpu_custom_call.1} parent=11 // pred_check_branch
          %220 = sbr.rel (%p218) target = $region28
        $region27: #{tpu_custom_call.1} parent=11 // pred_region
          _
        $region28: #{tpu_custom_call.1} parent=11 // pred_fallthru
          _
        // Predicated region
        $region29: #{tpu_custom_call.1} parent=11 // pred_check
          %p221 = pneg %p147
        $region30: #{tpu_custom_call.1} parent=11 // pred_check_branch
          %223 = sbr.rel (%p221) target = $region32
        $region31: #{tpu_custom_call.1} parent=11 // pred_region
          _
        $region32: #{tpu_custom_call.1} parent=11 // pred_fallthru
          _
        // Predicated region
        $region33: #{tpu_custom_call.1} parent=11 // pred_check
          %p224 = pneg %p168
        $region34: #{tpu_custom_call.1} parent=11 // pred_check_branch
          %226 = sbr.rel (%p224) target = $region36
        $region35: #{tpu_custom_call.1} parent=11 // pred_region
          _
        $region36: #{tpu_custom_call.1} parent=11 // pred_fallthru
          _
      $region12: #{tpu_custom_call.1} parent=5 // pred_fallthru
        _
      %p227 = scmp.lt.s32.totalorder %s16, 2
      // Predicated region
      $region37: #{tpu_custom_call.1} parent=5 // pred_check
        %p228 = pneg %p227
      $region38: #{tpu_custom_call.1} parent=5 // pred_check_branch
        %230 = sbr.rel (%p228) target = $region40
      $region39: #{tpu_custom_call.1} parent=5 // pred_region
        // Predicated region
        $region41: #{tpu_custom_call.1} parent=39 // pred_check
          %p231 = pneg %p36
        $region42: #{tpu_custom_call.1} parent=39 // pred_check_branch
          %233 = sbr.rel (%p231) target = $region44
        $region43: #{tpu_custom_call.1} parent=39 // pred_region
          %s234 = sand.u32 %s26, 1
          %s235 = scalar_lea.sflag [#allocation3], %s234
          %s236 = sand.u32 %s26, 1
          %s237 = smul.addr %s236, 16
          %s238 = scalar_lea.vmem [#allocation2], %s237
          %s239 = smul.u32 4, %s16
          %s241 = ssub.s32 256, 256
          %242 = vsyncadd %s235, %s241
          %s243 = smul.addr %s239, 64
          %s244 = scalar_lea.hbm %s0, %s243
          %s245 = sshll.u32 %s238, 4
          %s246 = int_to_ptr.vmem [resolvable:$true] %s245
          %251 = dma.hbm_to_vmem [thread:$0]  %s244, 256, %s246, %s235, 64, 64, 4
        $region44: #{tpu_custom_call.1} parent=39 // pred_fallthru
          _
      $region40: #{tpu_custom_call.1} parent=5 // pred_fallthru
        _
      %p252 = scmp.le.s32.totalorder 1, %s16
      %p253 = scmp.lt.s32.totalorder %s16, 3
      %p254 = pnand %p252, %p253
      %p255 = pneg %p254
      // Predicated region
      $region45: #{tpu_custom_call.1} parent=5 // pred_check
        _
      $region46: #{tpu_custom_call.1} parent=5 // pred_check_branch
        %257 = sbr.rel (%p254) target = $region48
      $region47: #{tpu_custom_call.1} parent=5 // pred_region
        %s258 = ssub.s32 %s16, 1
        %s259 = sand.u32 %s29, 1
        %s260 = scalar_lea.sflag [#allocation3], %s259
        %s261 = sand.u32 %s29, 1
        %s262 = smul.addr %s261, 16
        %s263 = scalar_lea.vmem [#allocation2], %s262
        // Predicated region
        $region49: #{tpu_custom_call.1} parent=47 // pred_check
          %p264 = pneg %p42
        $region50: #{tpu_custom_call.1} parent=47 // pred_check_branch
          %266 = sbr.rel (%p264) target = $region52
        $region51: #{tpu_custom_call.1} parent=47 // pred_region
          %267 = dma.done %s260, 256
        $region52: #{tpu_custom_call.1} parent=47 // pred_fallthru
          _
        %s268 = sand.u32 %s29, 1
        %s269 = scalar_lea.sflag [#allocation3], %s268
        %s270 = sand.u32 %s29, 1
        %s271 = smul.addr %s270, 16
        %s272 = scalar_lea.vmem [#allocation2], %s271
        %p273 = pneg %p42
        %p274 = pneg %p39
        %p275 = pneg %p63
        %p276 = pneg %p60
        %p277 = pneg %p84
        %p278 = pneg %p81
        %p279 = pneg %p105
        %p280 = pneg %p102
        %p281 = pneg %p126
        %p282 = pneg %p123
        %p283 = pneg %p147
        %p284 = pneg %p144
        %p285 = pneg %p168
        %p286 = pneg %p165
        %p287 = pneg %p194
        %p288 = pneg %p191
        %s289 = smul.u32 4, %s21
        %p290 = scmp.lt.s32.totalorder %s289, 7
        %s291 = scalar_select %p290, %s289, 7
        %s292 = smul.addr %s291, 8
        %s293 = scalar_lea.vmem %s7, %s292
        %s294 = smul.u32 4, %s21
        %s295 = smul.u32 4, %s21
        %p296 = scmp.lt.s32.totalorder %s295, 7
        %s297 = scalar_select %p296, %s295, 7
        %s298 = smul.addr %s297, 8
        %s299 = scalar_lea.vmem %s7, %s298
        %s300 = smul.u32 4, %s21
        %v302 = vld [vmem:[%s263] sm:$0xf]
        %v303 = vld [vmem:[%s263 + $0x4] sm:$0xf]
        %v304 = vld [vmem:[%s263 + $0x8] sm:$0xf]
        %v305 = vld [vmem:[%s263 + $0xc] sm:$0xf]
        %v306 = vld [vmem:[%s1] sm:$0xff]
        %v307 = vld [vmem:[%s1 + $0x8] sm:$0xff]
        %v308 = vld [vmem:[%s1 + $0x10] sm:$0xff]
        %v309 = vld [vmem:[%s1 + $0x18] sm:$0xff]
        %v310 = vld [vmem:[%s1 + $0x20] sm:$0xff]
        %v311 = vld [vmem:[%s1 + $0x28] sm:$0xff]
        %v312 = vld [vmem:[%s1 + $0x30] sm:$0xff]
        %v313 = vld [vmem:[%s1 + $0x38] sm:$0xff]
        %v314 = vld [vmem:[%s2] sm:$0x3]
        %v316 = vlaneseq
        %v317 = vshrl.u32 %v316, 7
        %v318 = vsub.s32 0, %v317
        %v319 = vrot.slane %v314, %v318
        %v320 = vlaneseq
        %v321 = vshrl.u32 %v320, 7
        %v322 = vsub.s32 1, %v321
        %v323 = vrot.slane %v314, %v322
        %v330 = vunpack.c.l.b16 %v302
        %v331 = vunpack.c.l.b16 %v303
        %v332 = vunpack.c.l.b16 %v304
        %v333 = vunpack.c.l.b16 %v305
        %v334 = vpack.c.b16 %v331, %v330
        %v335 = vpack.c.b16 %v333, %v332
        %v344 = vunpack.c.l.b16 %v306
        %v345 = vunpack.c.h.b16 %v306
        %v346 = vunpack.c.l.b16 %v307
        %v347 = vunpack.c.h.b16 %v307
        %v348 = vunpack.c.l.b16 %v308
        %v349 = vunpack.c.h.b16 %v308
        %v350 = vunpack.c.l.b16 %v309
        %v351 = vunpack.c.h.b16 %v309
        %v352 = vunpack.c.l.b16 %v310
        %v353 = vunpack.c.h.b16 %v310
        %v354 = vunpack.c.l.b16 %v311
        %v355 = vunpack.c.h.b16 %v311
        %v356 = vunpack.c.l.b16 %v312
        %v357 = vunpack.c.h.b16 %v312
        %v358 = vunpack.c.l.b16 %v313
        %v359 = vunpack.c.h.b16 %v313
        %v360 = vpack.c.b16 %v346, %v344
        %v361 = vpack.c.b16 %v347, %v345
        %v362 = vpack.c.b16 %v350, %v348
        %v363 = vpack.c.b16 %v351, %v349
        %v364 = vpack.c.b16 %v354, %v352
        %v365 = vpack.c.b16 %v355, %v353
        %v366 = vpack.c.b16 %v358, %v356
        %v367 = vpack.c.b16 %v359, %v357
        %vm376 = vcmask 523264
        %v378 = vsel %vm376, %v334, 0
        %v381 = vsel %vm376, %v335, 0
        %383 = vmatprep.subr.bf16.mxu0 %v361
        %384 = vmatpush1.bf16.msra.mxu0 %v360
        %385 = vmatprep.subr.bf16.mxu0 %v363
        %386 = vmatpush1.bf16.msra.mxu0 %v362
        %387 = vmatprep.subr.bf16.mxu0 %v365
        %388 = vmatpush1.bf16.msra.mxu0 %v364
        %389 = vmatprep.subr.bf16.mxu0 %v367
        %390 = vmatpush1.bf16.msra.mxu0 %v366
        %391 = vmatprep.subr.bf16.mxu0 0
        %392 = vmatpush1.bf16.msra.mxu0 0
        %393 = vmatprep.subr.bf16.mxu0 0
        %394 = vmatpush1.bf16.msra.mxu0 0
        %395 = vmatprep.subr.bf16.mxu0 0
        %396 = vmatpush1.bf16.msra.mxu0 0
        %397 = vmatprep.subr.bf16.mxu0 0
        %398 = vmatpush1.bf16.msra.mxu0 0
        %399 = vmatprep.subr.bf16.mxu0 0
        %400 = vmatpush1.bf16.msra.mxu0 0
        %401 = vmatprep.subr.bf16.mxu0 0
        %402 = vmatpush1.bf16.msra.mxu0 0
        %403 = vmatprep.subr.bf16.mxu0 0
        %404 = vmatpush1.bf16.msra.mxu0 0
        %405 = vmatprep.subr.bf16.mxu0 0
        %406 = vmatpush1.bf16.msra.mxu0 0
        %407 = vmatprep.subr.bf16.mxu0 0
        %408 = vmatpush1.bf16.msra.mxu0 0
        %409 = vmatprep.subr.bf16.mxu0 0
        %410 = vmatpush1.bf16.msra.mxu0 0
        %411 = vmatprep.subr.bf16.mxu0 0
        %412 = vmatpush1.bf16.msra.mxu0 0
        %413 = vmatprep.subr.bf16.mxu0 0
        %414 = vmatpush1.bf16.msra.mxu0 0
        %415 = vmatprep.mubr.bf16.mxu0 0
        %416 = vmatmul.mubr.bf16.gmra.mrb[0].mxu0 %v378
        %v417 = vpop.f32.mrb[0].mxu0
        %v418 = vadd.f32 %v319, %v417
        %v419 = vpop.f32.mrb[0].mxu0
        %v420 = vadd.f32 %v323, %v419
        %v421 = vpop.f32.mrb[0].mxu0
        %v422 = vadd.f32 %v319, %v421
        %v423 = vpop.f32.mrb[0].mxu0
        %v424 = vadd.f32 %v323, %v423
        %425 = vmatprep.mubr.bf16.mxu0 0
        %426 = vmatmul.mubr.bf16.gmra.mrb[0].mxu0 %v381
        %v427 = vpop.f32.mrb[0].mxu0
        %v428 = vadd.f32 %v319, %v427
        %v429 = vpop.f32.mrb[0].mxu0
        %v430 = vadd.f32 %v323, %v429
        %v431 = vpop.f32.mrb[0].mxu0
        %v432 = vadd.f32 %v319, %v431
        %v433 = vpop.f32.mrb[0].mxu0
        %v434 = vadd.f32 %v323, %v433
        %435 = vdwg.mxu0
        %440 = vrot.lane.b32.xlu0 %v418, 96
        %v441 = vpop.permute.xlu0 %440
        %442 = vrot.lane.b32.xlu0 %v422, 96
        %v443 = vpop.permute.xlu0 %442
        %444 = vrot.lane.b32.xlu0 %v428, 96
        %v445 = vpop.permute.xlu0 %444
        %446 = vrot.lane.b32.xlu0 %v432, 96
        %v447 = vpop.permute.xlu0 %446
        %v452 = vmul.f32 %v418, %v441
        %v453 = vmul.f32 %v422, %v443
        %v454 = vmul.f32 %v428, %v445
        %v455 = vmul.f32 %v432, %v447
        %vm456 = vcmask 130048
        %v457 = vsel %vm456, %v452, 0.0
        %458 = vadd.xlane.f32.xlu0 %v457
        %v459 = vpop.xlane.xlu0 %458
        %v460 = vsel %vm456, %v453, 0.0
        %461 = vadd.xlane.f32.xlu0 %v460
        %v462 = vpop.xlane.xlu0 %461
        %v463 = vsel %vm456, %v454, 0.0
        %464 = vadd.xlane.f32.xlu0 %v463
        %v465 = vpop.xlane.xlu0 %464
        %v466 = vsel %vm456, %v455, 0.0
        %467 = vadd.xlane.f32.xlu0 %v466
        %v468 = vpop.xlane.xlu0 %467
        %469 = vrot.lane.b32.xlu0 %v418, 80
        %v470 = vpop.permute.xlu0 %469
        %471 = vrot.lane.b32.xlu0 %v422, 80
        %v472 = vpop.permute.xlu0 %471
        %473 = vrot.lane.b32.xlu0 %v428, 80
        %v474 = vpop.permute.xlu0 %473
        %475 = vrot.lane.b32.xlu0 %v432, 80
        %v476 = vpop.permute.xlu0 %475
        %v481 = vmul.f32 %v418, %v470
        %v482 = vmul.f32 %v422, %v472
        %v483 = vmul.f32 %v428, %v474
        %v484 = vmul.f32 %v432, %v476
        %v485 = vsel %vm456, %v481, 0.0
        %486 = vadd.xlane.f32.xlu0 %v485
        %v487 = vpop.xlane.xlu0 %486
        %v488 = vsel %vm456, %v482, 0.0
        %489 = vadd.xlane.f32.xlu0 %v488
        %v490 = vpop.xlane.xlu0 %489
        %v491 = vsel %vm456, %v483, 0.0
        %492 = vadd.xlane.f32.xlu0 %v491
        %v493 = vpop.xlane.xlu0 %492
        %v494 = vsel %vm456, %v484, 0.0
        %495 = vadd.xlane.f32.xlu0 %v494
        %v496 = vpop.xlane.xlu0 %495
        %497 = vrot.lane.b32.xlu0 %v418, 64
        %v498 = vpop.permute.xlu0 %497
        %499 = vrot.lane.b32.xlu0 %v422, 64
        %v500 = vpop.permute.xlu0 %499
        %501 = vrot.lane.b32.xlu0 %v428, 64
        %v502 = vpop.permute.xlu0 %501
        %503 = vrot.lane.b32.xlu0 %v432, 64
        %v504 = vpop.permute.xlu0 %503
        %v509 = vmul.f32 %v418, %v498
        %v510 = vmul.f32 %v422, %v500
        %v511 = vmul.f32 %v428, %v502
        %v512 = vmul.f32 %v432, %v504
        %v513 = vsel %vm456, %v509, 0.0
        %514 = vadd.xlane.f32.xlu0 %v513
        %v515 = vpop.xlane.xlu0 %514
        %v516 = vsel %vm456, %v510, 0.0
        %517 = vadd.xlane.f32.xlu0 %v516
        %v518 = vpop.xlane.xlu0 %517
        %v519 = vsel %vm456, %v511, 0.0
        %520 = vadd.xlane.f32.xlu0 %v519
        %v521 = vpop.xlane.xlu0 %520
        %v522 = vsel %vm456, %v512, 0.0
        %523 = vadd.xlane.f32.xlu0 %v522
        %v524 = vpop.xlane.xlu0 %523
        %525 = vrot.lane.b32.xlu0 %v418, 48
        %v526 = vpop.permute.xlu0 %525
        %527 = vrot.lane.b32.xlu0 %v422, 48
        %v528 = vpop.permute.xlu0 %527
        %529 = vrot.lane.b32.xlu0 %v428, 48
        %v530 = vpop.permute.xlu0 %529
        %531 = vrot.lane.b32.xlu0 %v432, 48
        %v532 = vpop.permute.xlu0 %531
        %v537 = vmul.f32 %v418, %v526
        %v538 = vmul.f32 %v422, %v528
        %v539 = vmul.f32 %v428, %v530
        %v540 = vmul.f32 %v432, %v532
        %v541 = vsel %vm456, %v537, 0.0
        %542 = vadd.xlane.f32.xlu0 %v541
        %v543 = vpop.xlane.xlu0 %542
        %v544 = vsel %vm456, %v538, 0.0
        %545 = vadd.xlane.f32.xlu0 %v544
        %v546 = vpop.xlane.xlu0 %545
        %v547 = vsel %vm456, %v539, 0.0
        %548 = vadd.xlane.f32.xlu0 %v547
        %v549 = vpop.xlane.xlu0 %548
        %v550 = vsel %vm456, %v540, 0.0
        %551 = vadd.xlane.f32.xlu0 %v550
        %v552 = vpop.xlane.xlu0 %551
        %553 = vrot.lane.b32.xlu0 %v418, 32
        %v554 = vpop.permute.xlu0 %553
        %555 = vrot.lane.b32.xlu0 %v422, 32
        %v556 = vpop.permute.xlu0 %555
        %557 = vrot.lane.b32.xlu0 %v428, 32
        %v558 = vpop.permute.xlu0 %557
        %559 = vrot.lane.b32.xlu0 %v432, 32
        %v560 = vpop.permute.xlu0 %559
        %v565 = vmul.f32 %v418, %v554
        %v566 = vmul.f32 %v422, %v556
        %v567 = vmul.f32 %v428, %v558
        %v568 = vmul.f32 %v432, %v560
        %v569 = vsel %vm456, %v565, 0.0
        %570 = vadd.xlane.f32.xlu0 %v569
        %v571 = vpop.xlane.xlu0 %570
        %v572 = vsel %vm456, %v566, 0.0
        %573 = vadd.xlane.f32.xlu0 %v572
        %v574 = vpop.xlane.xlu0 %573
        %v575 = vsel %vm456, %v567, 0.0
        %576 = vadd.xlane.f32.xlu0 %v575
        %v577 = vpop.xlane.xlu0 %576
        %v578 = vsel %vm456, %v568, 0.0
        %579 = vadd.xlane.f32.xlu0 %v578
        %v580 = vpop.xlane.xlu0 %579
        %581 = vrot.lane.b32.xlu0 %v418, 16
        %v582 = vpop.permute.xlu0 %581
        %583 = vrot.lane.b32.xlu0 %v422, 16
        %v584 = vpop.permute.xlu0 %583
        %585 = vrot.lane.b32.xlu0 %v428, 16
        %v586 = vpop.permute.xlu0 %585
        %587 = vrot.lane.b32.xlu0 %v432, 16
        %v588 = vpop.permute.xlu0 %587
        %v593 = vmul.f32 %v418, %v582
        %v594 = vmul.f32 %v422, %v584
        %v595 = vmul.f32 %v428, %v586
        %v596 = vmul.f32 %v432, %v588
        %v597 = vsel %vm456, %v593, 0.0
        %598 = vadd.xlane.f32.xlu0 %v597
        %v599 = vpop.xlane.xlu0 %598
        %v600 = vsel %vm456, %v594, 0.0
        %601 = vadd.xlane.f32.xlu0 %v600
        %v602 = vpop.xlane.xlu0 %601
        %v603 = vsel %vm456, %v595, 0.0
        %604 = vadd.xlane.f32.xlu0 %v603
        %v605 = vpop.xlane.xlu0 %604
        %v606 = vsel %vm456, %v596, 0.0
        %607 = vadd.xlane.f32.xlu0 %v606
        %v608 = vpop.xlane.xlu0 %607
        %vm609 = vcmask 7168
        %v610 = vsel %vm609, %v459, %v487
        %v611 = vsel %vm609, %v462, %v490
        %v612 = vsel %vm609, %v465, %v493
        %v613 = vsel %vm609, %v468, %v496
        %vm614 = vcmask 15360
        %v615 = vsel %vm614, %v610, %v515
        %v616 = vsel %vm614, %v611, %v518
        %v617 = vsel %vm614, %v612, %v521
        %v618 = vsel %vm614, %v613, %v524
        %vm619 = vcmask 23552
        %v620 = vsel %vm619, %v615, %v543
        %v621 = vsel %vm619, %v616, %v546
        %v622 = vsel %vm619, %v617, %v549
        %v623 = vsel %vm619, %v618, %v552
        %vm624 = vcmask 31744
        %v625 = vsel %vm624, %v620, %v571
        %v626 = vsel %vm624, %v621, %v574
        %v627 = vsel %vm624, %v622, %v577
        %v628 = vsel %vm624, %v623, %v580
        %vm629 = vcmask 39936
        %v630 = vsel %vm629, %v625, %v599
        %v631 = vsel %vm629, %v626, %v602
        %v632 = vsel %vm629, %v627, %v605
        %v633 = vsel %vm629, %v628, %v608
        %vm634 = vcmask 48128
        %v635 = vsel %vm634, %v630, -inf
        %636 = vmax.xlane.f32.xlu0 %v635
        %v637 = vpop.xlane.xlu0 %636
        %v638 = vsel %vm634, %v631, -inf
        %639 = vmax.xlane.f32.xlu0 %v638
        %v640 = vpop.xlane.xlu0 %639
        %v641 = vsel %vm634, %v632, -inf
        %642 = vmax.xlane.f32.xlu0 %v641
        %v643 = vpop.xlane.xlu0 %642
        %v644 = vsel %vm634, %v633, -inf
        %645 = vmax.xlane.f32.xlu0 %v644
        %v646 = vpop.xlane.xlu0 %645
        %v647 = vsub.f32 %v630, %v637
        %v648 = vsub.f32 %v631, %v640
        %v649 = vsub.f32 %v632, %v643
        %v650 = vsub.f32 %v633, %v646
        %v651 = vmul.f32 %v647, 1.442695
        %v652 = vpow.pop %v651
        %v653 = vmul.f32 %v648, 1.442695
        %v654 = vpow.pop %v653
        %v655 = vmul.f32 %v649, 1.442695
        %v656 = vpow.pop %v655
        %v657 = vmul.f32 %v650, 1.442695
        %v658 = vpow.pop %v657
        %v659 = vsel %vm619, %v652, 0.0
        %660 = vadd.xlane.f32.xlu0 %v659
        %v661 = vpop.xlane.xlu0 %660
        %v662 = vsel %vm619, %v654, 0.0
        %663 = vadd.xlane.f32.xlu0 %v662
        %v664 = vpop.xlane.xlu0 %663
        %v665 = vsel %vm619, %v656, 0.0
        %666 = vadd.xlane.f32.xlu0 %v665
        %v667 = vpop.xlane.xlu0 %666
        %v668 = vsel %vm619, %v658, 0.0
        %669 = vadd.xlane.f32.xlu0 %v668
        %v670 = vpop.xlane.xlu0 %669
        %v671 = vrcp.pop %v661
        %v672 = vmul.f32 %v652, %v671
        %v673 = vrcp.pop %v664
        %v674 = vmul.f32 %v654, %v673
        %v675 = vrcp.pop %v667
        %v676 = vmul.f32 %v656, %v675
        %v677 = vrcp.pop %v670
        %v678 = vmul.f32 %v658, %v677
        %683 = vrot.lane.b32.xlu0 %v652, 125
        %v684 = vpop.permute.xlu0 %683
        %685 = vrot.lane.b32.xlu0 %v654, 125
        %v686 = vpop.permute.xlu0 %685
        %687 = vrot.lane.b32.xlu0 %v656, 125
        %v688 = vpop.permute.xlu0 %687
        %689 = vrot.lane.b32.xlu0 %v658, 125
        %v690 = vpop.permute.xlu0 %689
        %v695 = vsel %vm619, %v684, 0.0
        %696 = vadd.xlane.f32.xlu0 %v695
        %v697 = vpop.xlane.xlu0 %696
        %v698 = vsel %vm619, %v686, 0.0
        %699 = vadd.xlane.f32.xlu0 %v698
        %v700 = vpop.xlane.xlu0 %699
        %v701 = vsel %vm619, %v688, 0.0
        %702 = vadd.xlane.f32.xlu0 %v701
        %v703 = vpop.xlane.xlu0 %702
        %v704 = vsel %vm619, %v690, 0.0
        %705 = vadd.xlane.f32.xlu0 %v704
        %v706 = vpop.xlane.xlu0 %705
        %v707 = vrcp.pop %v697
        %v708 = vmul.f32 %v652, %v707
        %v709 = vrcp.pop %v700
        %v710 = vmul.f32 %v654, %v709
        %v711 = vrcp.pop %v703
        %v712 = vmul.f32 %v656, %v711
        %v713 = vrcp.pop %v706
        %v714 = vmul.f32 %v658, %v713
        %716 = vset.pattern.permute.xlu0 0
        %717 = vperm.xlu0 %716, %v672
        %v718 = vpop.permute.xlu0 %717
        %721 = vset.pattern.permute.xlu0 0
        %722 = vperm.xlu0 %721, %v674
        %v723 = vpop.permute.xlu0 %722
        %726 = vset.pattern.permute.xlu0 0
        %727 = vperm.xlu0 %726, %v676
        %v728 = vpop.permute.xlu0 %727
        %731 = vset.pattern.permute.xlu0 0
        %732 = vperm.xlu0 %731, %v678
        %v733 = vpop.permute.xlu0 %732
        %v735 = vmul.f32 %v718, %v420
        %v736 = vmul.f32 %v723, %v424
        %v737 = vmul.f32 %v728, %v430
        %v738 = vmul.f32 %v733, %v434
        %739 = vset.pattern.permute.xlu0 1
        %740 = vperm.xlu0 %739, %v672
        %v741 = vpop.permute.xlu0 %740
        %743 = vset.pattern.permute.xlu0 1
        %744 = vperm.xlu0 %743, %v674
        %v745 = vpop.permute.xlu0 %744
        %747 = vset.pattern.permute.xlu0 1
        %748 = vperm.xlu0 %747, %v676
        %v749 = vpop.permute.xlu0 %748
        %751 = vset.pattern.permute.xlu0 1
        %752 = vperm.xlu0 %751, %v678
        %v753 = vpop.permute.xlu0 %752
        %v755 = vmul.f32 %v741, %v420
        %v756 = vmul.f32 %v745, %v424
        %v757 = vmul.f32 %v749, %v430
        %v758 = vmul.f32 %v753, %v434
        %763 = vrot.lane.b32.xlu0 %v755, 112
        %v764 = vpop.permute.xlu0 %763
        %765 = vrot.lane.b32.xlu0 %v756, 112
        %v766 = vpop.permute.xlu0 %765
        %767 = vrot.lane.b32.xlu0 %v757, 112
        %v768 = vpop.permute.xlu0 %767
        %769 = vrot.lane.b32.xlu0 %v758, 112
        %v770 = vpop.permute.xlu0 %769
        %v775 = vadd.f32 %v735, %v764
        %v776 = vadd.f32 %v736, %v766
        %v777 = vadd.f32 %v737, %v768
        %v778 = vadd.f32 %v738, %v770
        %779 = vset.pattern.permute.xlu0 2
        %780 = vperm.xlu0 %779, %v672
        %v781 = vpop.permute.xlu0 %780
        %783 = vset.pattern.permute.xlu0 2
        %784 = vperm.xlu0 %783, %v674
        %v785 = vpop.permute.xlu0 %784
        %787 = vset.pattern.permute.xlu0 2
        %788 = vperm.xlu0 %787, %v676
        %v789 = vpop.permute.xlu0 %788
        %791 = vset.pattern.permute.xlu0 2
        %792 = vperm.xlu0 %791, %v678
        %v793 = vpop.permute.xlu0 %792
        %v795 = vmul.f32 %v781, %v420
        %v796 = vmul.f32 %v785, %v424
        %v797 = vmul.f32 %v789, %v430
        %v798 = vmul.f32 %v793, %v434
        %803 = vrot.lane.b32.xlu0 %v795, 96
        %v804 = vpop.permute.xlu0 %803
        %805 = vrot.lane.b32.xlu0 %v796, 96
        %v806 = vpop.permute.xlu0 %805
        %807 = vrot.lane.b32.xlu0 %v797, 96
        %v808 = vpop.permute.xlu0 %807
        %809 = vrot.lane.b32.xlu0 %v798, 96
        %v810 = vpop.permute.xlu0 %809
        %v815 = vadd.f32 %v775, %v804
        %v816 = vadd.f32 %v776, %v806
        %v817 = vadd.f32 %v777, %v808
        %v818 = vadd.f32 %v778, %v810
        %820 = vset.pattern.permute.xlu0 3
        %821 = vperm.xlu0 %820, %v708
        %v822 = vpop.permute.xlu0 %821
        %825 = vset.pattern.permute.xlu0 3
        %826 = vperm.xlu0 %825, %v710
        %v827 = vpop.permute.xlu0 %826
        %830 = vset.pattern.permute.xlu0 3
        %831 = vperm.xlu0 %830, %v712
        %v832 = vpop.permute.xlu0 %831
        %835 = vset.pattern.permute.xlu0 3
        %836 = vperm.xlu0 %835, %v714
        %v837 = vpop.permute.xlu0 %836
        %v839 = vmul.f32 %v822, %v420
        %v840 = vmul.f32 %v827, %v424
        %v841 = vmul.f32 %v832, %v430
        %v842 = vmul.f32 %v837, %v434
        %843 = vset.pattern.permute.xlu0 4
        %844 = vperm.xlu0 %843, %v708
        %v845 = vpop.permute.xlu0 %844
        %847 = vset.pattern.permute.xlu0 4
        %848 = vperm.xlu0 %847, %v710
        %v849 = vpop.permute.xlu0 %848
        %851 = vset.pattern.permute.xlu0 4
        %852 = vperm.xlu0 %851, %v712
        %v853 = vpop.permute.xlu0 %852
        %855 = vset.pattern.permute.xlu0 4
        %856 = vperm.xlu0 %855, %v714
        %v857 = vpop.permute.xlu0 %856
        %v859 = vmul.f32 %v845, %v420
        %v860 = vmul.f32 %v849, %v424
        %v861 = vmul.f32 %v853, %v430
        %v862 = vmul.f32 %v857, %v434
        %867 = vrot.lane.b32.xlu0 %v859, 112
        %v868 = vpop.permute.xlu0 %867
        %869 = vrot.lane.b32.xlu0 %v860, 112
        %v870 = vpop.permute.xlu0 %869
        %871 = vrot.lane.b32.xlu0 %v861, 112
        %v872 = vpop.permute.xlu0 %871
        %873 = vrot.lane.b32.xlu0 %v862, 112
        %v874 = vpop.permute.xlu0 %873
        %v879 = vadd.f32 %v839, %v868
        %v880 = vadd.f32 %v840, %v870
        %v881 = vadd.f32 %v841, %v872
        %v882 = vadd.f32 %v842, %v874
        %883 = vset.pattern.permute.xlu0 5
        %884 = vperm.xlu0 %883, %v708
        %v885 = vpop.permute.xlu0 %884
        %887 = vset.pattern.permute.xlu0 5
        %888 = vperm.xlu0 %887, %v710
        %v889 = vpop.permute.xlu0 %888
        %891 = vset.pattern.permute.xlu0 5
        %892 = vperm.xlu0 %891, %v712
        %v893 = vpop.permute.xlu0 %892
        %895 = vset.pattern.permute.xlu0 5
        %896 = vperm.xlu0 %895, %v714
        %v897 = vpop.permute.xlu0 %896
        %v899 = vmul.f32 %v885, %v420
        %v900 = vmul.f32 %v889, %v424
        %v901 = vmul.f32 %v893, %v430
        %v902 = vmul.f32 %v897, %v434
        %907 = vrot.lane.b32.xlu0 %v899, 96
        %v908 = vpop.permute.xlu0 %907
        %909 = vrot.lane.b32.xlu0 %v900, 96
        %v910 = vpop.permute.xlu0 %909
        %911 = vrot.lane.b32.xlu0 %v901, 96
        %v912 = vpop.permute.xlu0 %911
        %913 = vrot.lane.b32.xlu0 %v902, 96
        %v914 = vpop.permute.xlu0 %913
        %v919 = vadd.f32 %v879, %v908
        %v920 = vadd.f32 %v880, %v910
        %v921 = vadd.f32 %v881, %v912
        %v922 = vadd.f32 %v882, %v914
        %923 = vrot.lane.b32.xlu0 %v418, 112
        %v924 = vpop.permute.xlu0 %923
        %925 = vrot.lane.b32.xlu0 %v422, 112
        %v926 = vpop.permute.xlu0 %925
        %927 = vrot.lane.b32.xlu0 %v428, 112
        %v928 = vpop.permute.xlu0 %927
        %929 = vrot.lane.b32.xlu0 %v432, 112
        %v930 = vpop.permute.xlu0 %929
        %939 = vrot.lane.b32.xlu0 %v815, 16
        %v940 = vpop.permute.xlu0 %939
        %941 = vrot.lane.b32.xlu0 %v816, 16
        %v942 = vpop.permute.xlu0 %941
        %943 = vrot.lane.b32.xlu0 %v817, 16
        %v944 = vpop.permute.xlu0 %943
        %945 = vrot.lane.b32.xlu0 %v818, 16
        %v946 = vpop.permute.xlu0 %945
        %955 = vrot.lane.b32.xlu0 %v919, 112
        %v956 = vpop.permute.xlu0 %955
        %957 = vrot.lane.b32.xlu0 %v920, 112
        %v958 = vpop.permute.xlu0 %957
        %959 = vrot.lane.b32.xlu0 %v921, 112
        %v960 = vpop.permute.xlu0 %959
        %961 = vrot.lane.b32.xlu0 %v922, 112
        %v962 = vpop.permute.xlu0 %961
        %v967 = vsel %vm456, %v924, %v940
        %v968 = vsel %vm456, %v926, %v942
        %v969 = vsel %vm456, %v928, %v944
        %v970 = vsel %vm456, %v930, %v946
        %vm971 = vcmask 261120
        %v972 = vsel %vm971, %v967, %v956
        %v973 = vsel %vm971, %v968, %v958
        %v974 = vsel %vm971, %v969, %v960
        %v975 = vsel %vm971, %v970, %v962
        %v976 = vpack.c.bf16 %v973, %v972
        %v977 = vpack.c.bf16 %v975, %v974
        %v978 = vld [vmem:[%s3] sm:$0xf]
        %v979 = vld [vmem:[%s3 + $0x4] sm:$0xf]
        %v980 = vld [vmem:[%s3 + $0x8] sm:$0xf]
        %v981 = vld [vmem:[%s3 + $0xc] sm:$0xf]
        %v982 = vld [vmem:[%s3 + $0x10] sm:$0xf]
        %v983 = vld [vmem:[%s3 + $0x14] sm:$0xf]
        %v984 = vld [vmem:[%s4] sm:$0x1]
        %v986 = vlaneseq
        %v987 = vshrl.u32 %v986, 7
        %v988 = vsub.s32 0, %v987
        %v989 = vrot.slane %v984, %v988
        %v997 = vunpack.c.l.b16 %v978
        %v998 = vunpack.c.l.b16 %v979
        %v999 = vunpack.c.l.b16 %v980
        %v1000 = vunpack.c.l.b16 %v981
        %v1001 = vunpack.c.l.b16 %v982
        %v1002 = vunpack.c.l.b16 %v983
        %v1003 = vpack.c.b16 %v998, %v997
        %v1004 = vpack.c.b16 %v1000, %v999
        %v1005 = vpack.c.b16 %v1002, %v1001
        %vm1009 = vcmask 392192
        %v1011 = vsel %vm1009, %v976, 0
        %v1014 = vsel %vm1009, %v977, 0
        %1016 = vmatprep.subr.bf16.mxu0 0
        %1017 = vmatpush1.bf16.msra.mxu0 %v1003
        %1018 = vmatprep.subr.bf16.mxu0 0
        %1019 = vmatpush1.bf16.msra.mxu0 %v1004
        %1020 = vmatprep.subr.bf16.mxu0 0
        %1021 = vmatpush1.bf16.msra.mxu0 %v1005
        %1022 = vmatprep.subr.bf16.mxu0 0
        %1023 = vmatpush1.bf16.msra.mxu0 0
        %1024 = vmatprep.subr.bf16.mxu0 0
        %1025 = vmatpush1.bf16.msra.mxu0 0
        %1026 = vmatprep.subr.bf16.mxu0 0
        %1027 = vmatpush1.bf16.msra.mxu0 0
        %1028 = vmatprep.subr.bf16.mxu0 0
        %1029 = vmatpush1.bf16.msra.mxu0 0
        %1030 = vmatprep.subr.bf16.mxu0 0
        %1031 = vmatpush1.bf16.msra.mxu0 0
        %1032 = vmatprep.subr.bf16.mxu0 0
        %1033 = vmatpush1.bf16.msra.mxu0 0
        %1034 = vmatprep.subr.bf16.mxu0 0
        %1035 = vmatpush1.bf16.msra.mxu0 0
        %1036 = vmatprep.subr.bf16.mxu0 0
        %1037 = vmatpush1.bf16.msra.mxu0 0
        %1038 = vmatprep.subr.bf16.mxu0 0
        %1039 = vmatpush1.bf16.msra.mxu0 0
        %1040 = vmatprep.subr.bf16.mxu0 0
        %1041 = vmatpush1.bf16.msra.mxu0 0
        %1042 = vmatprep.subr.bf16.mxu0 0
        %1043 = vmatpush1.bf16.msra.mxu0 0
        %1044 = vmatprep.subr.bf16.mxu0 0
        %1045 = vmatpush1.bf16.msra.mxu0 0
        %1046 = vmatprep.subr.bf16.mxu0 0
        %1047 = vmatpush1.bf16.msra.mxu0 0
        %1048 = vmatprep.mubr.bf16.mxu0 0
        %1049 = vmatmul.mubr.bf16.gmra.mrb[0].mxu0 %v1011
        %v1050 = vpop.f32.mrb[0].mxu0
        %v1051 = vadd.f32 %v989, %v1050
        %v1052 = vpop.f32.mrb[0].mxu0
        %v1053 = vpop.f32.mrb[0].mxu0
        %v1054 = vadd.f32 %v989, %v1053
        %v1055 = vpop.f32.mrb[0].mxu0
        %1056 = vmatprep.mubr.bf16.mxu0 0
        %1057 = vmatmul.mubr.bf16.gmra.mrb[0].mxu0 %v1014
        %v1058 = vpop.f32.mrb[0].mxu0
        %v1059 = vadd.f32 %v989, %v1058
        %v1060 = vpop.f32.mrb[0].mxu0
        %v1061 = vpop.f32.mrb[0].mxu0
        %v1062 = vadd.f32 %v989, %v1061
        %v1063 = vpop.f32.mrb[0].mxu0
        %1064 = vdwg.mxu0
        %v1065 = vmax.f32 %v1051, 0.0
        %v1066 = vmax.f32 %v1054, 0.0
        %v1067 = vmax.f32 %v1059, 0.0
        %v1068 = vmax.f32 %v1062, 0.0
        %v1069 = vpack.c.bf16 %v1066, %v1065
        %v1070 = vpack.c.bf16 %v1068, %v1067
        %v1071 = vld [vmem:[%s5] sm:$0xf]
        %v1072 = vld [vmem:[%s5 + $0x4] sm:$0xf]
        %v1073 = vld [vmem:[%s5 + $0x8] sm:$0xf]
        %v1074 = vld [vmem:[%s5 + $0xc] sm:$0xf]
        %v1075 = vld [vmem:[%s6] sm:$0x1]
        %v1077 = vlaneseq
        %v1078 = vshrl.u32 %v1077, 7
        %v1079 = vsub.s32 0, %v1078
        %v1080 = vrot.slane %v1075, %v1079
        %v1086 = vunpack.c.l.b16 %v1071
        %v1087 = vunpack.c.l.b16 %v1072
        %v1088 = vunpack.c.l.b16 %v1073
        %v1089 = vunpack.c.l.b16 %v1074
        %v1090 = vpack.c.b16 %v1087, %v1086
        %v1091 = vpack.c.b16 %v1089, %v1088
        %v1095 = vsel %vm971, %v1069, 0
        %v1098 = vsel %vm971, %v1070, 0
        %1100 = vmatprep.subr.bf16.mxu0 0
        %1101 = vmatpush1.bf16.msra.mxu0 %v1090
        %1102 = vmatprep.subr.bf16.mxu0 0
        %1103 = vmatpush1.bf16.msra.mxu0 %v1091
        %1104 = vmatprep.subr.bf16.mxu0 0
        %1105 = vmatpush1.bf16.msra.mxu0 0
        %1106 = vmatprep.subr.bf16.mxu0 0
        %1107 = vmatpush1.bf16.msra.mxu0 0
        %1108 = vmatprep.subr.bf16.mxu0 0
        %1109 = vmatpush1.bf16.msra.mxu0 0
        %1110 = vmatprep.subr.bf16.mxu0 0
        %1111 = vmatpush1.bf16.msra.mxu0 0
        %1112 = vmatprep.subr.bf16.mxu0 0
        %1113 = vmatpush1.bf16.msra.mxu0 0
        %1114 = vmatprep.subr.bf16.mxu0 0
        %1115 = vmatpush1.bf16.msra.mxu0 0
        %1116 = vmatprep.subr.bf16.mxu0 0
        %1117 = vmatpush1.bf16.msra.mxu0 0
        %1118 = vmatprep.subr.bf16.mxu0 0
        %1119 = vmatpush1.bf16.msra.mxu0 0
        %1120 = vmatprep.subr.bf16.mxu0 0
        %1121 = vmatpush1.bf16.msra.mxu0 0
        %1122 = vmatprep.subr.bf16.mxu0 0
        %1123 = vmatpush1.bf16.msra.mxu0 0
        %1124 = vmatprep.subr.bf16.mxu0 0
        %1125 = vmatpush1.bf16.msra.mxu0 0
        %1126 = vmatprep.subr.bf16.mxu0 0
        %1127 = vmatpush1.bf16.msra.mxu0 0
        %1128 = vmatprep.subr.bf16.mxu0 0
        %1129 = vmatpush1.bf16.msra.mxu0 0
        %1130 = vmatprep.subr.bf16.mxu0 0
        %1131 = vmatpush1.bf16.msra.mxu0 0
        %1132 = vmatprep.mubr.bf16.mxu0 0
        %1133 = vmatmul.mubr.bf16.gmra.mrb[0].mxu0 %v1095
        %v1134 = vpop.f32.mrb[0].mxu0
        %v1135 = vadd.f32 %v1080, %v1134
        %v1136 = vpop.f32.mrb[0].mxu0
        %v1137 = vpop.f32.mrb[0].mxu0
        %v1138 = vadd.f32 %v1080, %v1137
        %v1139 = vpop.f32.mrb[0].mxu0
        %1140 = vmatprep.mubr.bf16.mxu0 0
        %1141 = vmatmul.mubr.bf16.gmra.mrb[0].mxu0 %v1098
        %v1142 = vpop.f32.mrb[0].mxu0
        %v1143 = vadd.f32 %v1080, %v1142
        %v1144 = vpop.f32.mrb[0].mxu0
        %v1145 = vpop.f32.mrb[0].mxu0
        %v1146 = vadd.f32 %v1080, %v1145
        %v1147 = vpop.f32.mrb[0].mxu0
        %1148 = vdwg.mxu0
        %1149 = vst.msk [vmem:[%s299] sm:$0xff] %vm456, %v1135
        %1150 = vst.msk [vmem:[%s299 + $0x8] sm:$0xff] %vm456, %v1138
        %1151 = vst.msk [vmem:[%s299 + $0x10] sm:$0xff] %vm456, %v1143
        %1152 = vst.msk [vmem:[%s299 + $0x18] sm:$0xff] %vm456, %v1146
        %s1153 = smul.u32 4, %s21
        %p1154 = scmp.lt.s32.totalorder %s1153, 7
        %s1155 = scalar_select %p1154, %s1153, 7
        %s1156 = smul.addr %s1155, 8
        %s1157 = scalar_lea.vmem %s7, %s1156
        // Predicated region
        $region53: #{tpu_custom_call.1} parent=47 // pred_check
          %p1158 = pneg %p191
        $region54: #{tpu_custom_call.1} parent=47 // pred_check_branch
          %1160 = sbr.rel (%p1158) target = $region56
        $region55: #{tpu_custom_call.1} parent=47 // pred_region
          %s1161 = smul.u32 4, %s21
        $region56: #{tpu_custom_call.1} parent=47 // pred_fallthru
          _
      $region48: #{tpu_custom_call.1} parent=5 // pred_fallthru
        _
      %p1162 = scmp.le.s32.totalorder 2, %s16
      // Predicated region
      $region57: #{tpu_custom_call.1} parent=5 // pred_check
        %p1163 = pneg %p1162
      $region58: #{tpu_custom_call.1} parent=5 // pred_check_branch
        %1165 = sbr.rel (%p1163) target = $region60
      $region59: #{tpu_custom_call.1} parent=5 // pred_region
        %s1166 = ssub.s32 %s16, 2
        // Predicated region
        $region61: #{tpu_custom_call.1} parent=59 // pred_check
          %p1167 = pneg %p197
        $region62: #{tpu_custom_call.1} parent=59 // pred_check_branch
          %1169 = sbr.rel (%p1167) target = $region64
        $region63: #{tpu_custom_call.1} parent=59 // pred_region
          %s1170 = smul.u32 4, %s22
          %p1171 = scmp.lt.s32.totalorder %s1170, 7
          %s1172 = scalar_select %p1171, %s1170, 7
          %s1173 = smul.addr %s1172, 8
          %s1174 = scalar_lea.vmem %s7, %s1173
        $region64: #{tpu_custom_call.1} parent=59 // pred_fallthru
          _
      $region60: #{tpu_custom_call.1} parent=5 // pred_fallthru
        _
    $region6: #{tpu_custom_call.1} parent=1 // loop_footer
      %s20 = sadd.s32 1, %s16
    $region7: #{tpu_custom_call.1} parent=1 // loop_footer_branch
      %15 = sbr.rel target = $region3
    $region8: #{tpu_custom_call.1} parent=1 // loop_exit
      _
    %1175 = vsyncpa [#allocation3], 1
    %s1176 = scalar_lea.sflag [#allocation3], 1
    %1177 = vsyncpa %s1176, 1

</llo_original>
